<compile_context>
chip_gen: v6e
topology: v6e:2x2x1
jax: 0.10.0
libtpu: 0.0.40
codegen_flags: <defaults>
</compile_context>

<pallas_src>
import functools

import jax
import jax.numpy as jnp
from jax.experimental import pallas as pl
from jax.experimental.pallas import tpu as pltpu


def _codebook_kernel(x_ref, m_ref, s0_ref, stacked_ref, b_out_ref,
                     out_ref, nearest_ref):
    # x_ref: (C, TN) tile of one batch's tokens; tokens live on the lane axis.
    x = x_ref[...]

    # ---- squared-L2 surrogate with proj_in folded in (single MXU matmul) ----
    #   scores[k, n] = -2 * cb_k . (W_in^T x_n + b_in) + |cb_k|^2
    # (|z_n|^2 is constant per token -> irrelevant for the argmin.)
    scores = jnp.dot(m_ref[...], x, preferred_element_type=jnp.float32)
    scores = scores + s0_ref[...]                            # (K, TN)

    # ---- argmin over codes (axis 0 = sublanes), first-min tie-break ----
    K = scores.shape[0]
    min_s = jnp.min(scores, axis=0, keepdims=True)           # (1, TN)
    iota_k = jax.lax.broadcasted_iota(jnp.int32, scores.shape, 0)
    idx = jnp.min(jnp.where(scores == min_s, iota_k, K),
                  axis=0, keepdims=True)                     # (1, TN)
    onehot = (iota_k == idx).astype(jnp.float32)             # (K, TN)

    # ---- single onehot matmul: codebook gather AND fused proj_out ----
    # stacked = [codebook^T ; (codebook @ W_out)^T]  -> gathered is (L+C, TN)
    gathered = jnp.dot(stacked_ref[...], onehot,
                       preferred_element_type=jnp.float32)
    L = nearest_ref.shape[0]
    nearest_ref[...] = gathered[:L, :].astype(nearest_ref.dtype)
    out_ref[...] = (gathered[L:, :] + b_out_ref[...]).astype(out_ref.dtype)


def _round_up(x, m):
    return (x + m - 1) // m * m


def _vmem_budget_bytes():
    """Usable VMEM budget; defaults to v7x's 64 MiB/core so it is always safe."""
    cap = 64 << 20
    try:
        info = pltpu.get_tpu_info()
        cap = int(getattr(info, "vmem_capacity_bytes", cap))
    except Exception:
        pass
    return (cap * 3) // 4          # headroom for Mosaic internal scratch


def _pick_tile(hw, c, l, k, requested, budget):
    """Largest lane tile <= requested that fits the VMEM budget.

    No artificial grid-step manufacturing: on single-core v5e/v6e grid steps
    are a serial loop, so the biggest tile wins; on v7x the batch grid axis
    already provides the parallelism across the two TensorCores.
    """
    if hw <= 128:
        return hw                  # full-dim lane block is always legal
    # Bytes per lane column: double-buffered x/out/nearest blocks plus the
    # live in-kernel intermediates (scores, onehot, gathered).
    per_lane = 4 * (2 * (2 * c + l) + (2 * k + l + c))
    fixed = 4 * 2 * (k * c + k + (l + c) * k + c) + (2 << 20)
    max_tn = max(128, (budget - fixed) // per_lane)
    tn = min(requested, _round_up(hw, 128), max_tn)
    return max(128, (tn // 128) * 128)


@functools.partial(jax.jit, static_argnames=("tile_n",))
def codebook_forward(x, params, *, tile_n=4096):
    """x: (B, C_emb, H, W) f32.  Returns (out (B,C,H,W), nearest (B,HW,L))."""
    w_in, b_in, codebook, w_out, b_out = (
        params["w_in"], params["b_in"], params["codebook"],
        params["w_out"], params["b_out"])

    B, C, H, W = x.shape
    K, L = codebook.shape
    HW = H * W

    # Free view: tokens of each batch stay on the lane axis, no HBM transpose.
    x3 = x.reshape(B, C, HW)

    budget = _vmem_budget_bytes()
    tn = _pick_tile(HW, C, L, K, tile_n, budget)
    n_tiles = pl.cdiv(HW, tn)      # last tile may be ragged (Pallas clips it)

    # Tiny derived parameters, computed once under jit (outside the kernel).
    m = -2.0 * jnp.dot(codebook, w_in.T)                         # (K, C)
    cb_sq = jnp.sum(codebook * codebook, axis=-1, keepdims=True)  # (K, 1)
    s0 = cb_sq - 2.0 * jnp.dot(codebook, b_in.reshape(L, 1))      # (K, 1)
    stacked = jnp.concatenate(
        [codebook.T, jnp.dot(codebook, w_out).T], axis=0)         # (L+C, K)
    b_out_c = b_out.reshape(C, 1)                                 # (C, 1)

    # VMEM limit from actual per-step needs, capped at the physical budget.
    per_step = 4 * tn * (2 * (2 * C + L) + (2 * K + L + C))
    param_bytes = 4 * 2 * (K * C + K + (L + C) * K + C)
    vmem_limit = int(min(budget,
                         max(16 << 20, per_step + param_bytes + (2 << 20))))

    out3, nearest3 = pl.pallas_call(
        _codebook_kernel,
        out_shape=(
            jax.ShapeDtypeStruct((B, C, HW), jnp.float32),
            jax.ShapeDtypeStruct((B, L, HW), jnp.float32),
        ),
        grid_spec=pltpu.PrefetchScalarGridSpec(
            num_scalar_prefetch=0,
            grid=(B, n_tiles),
            in_specs=[
                pl.BlockSpec((pl.Squeezed(), C, tn), lambda b, i: (b, 0, i)),
                pl.BlockSpec((K, C), lambda b, i: (0, 0)),      # M
                pl.BlockSpec((K, 1), lambda b, i: (0, 0)),      # s0
                pl.BlockSpec((L + C, K), lambda b, i: (0, 0)),  # [cb^T; (cb@Wout)^T]
                pl.BlockSpec((C, 1), lambda b, i: (0, 0)),      # proj_out bias
            ],
            out_specs=[
                pl.BlockSpec((pl.Squeezed(), C, tn), lambda b, i: (b, 0, i)),
                pl.BlockSpec((pl.Squeezed(), L, tn), lambda b, i: (b, 0, i)),
            ],
        ),
        compiler_params=pltpu.CompilerParams(
            dimension_semantics=("parallel", "parallel"),
            vmem_limit_bytes=vmem_limit),
    )(x3, m, s0, stacked, b_out_c)

    out = out3.reshape(B, C, H, W)                 # free view
    nearest = jnp.transpose(nearest3, (0, 2, 1))   # (B, HW, L) — only transpose
    return out, nearest


def init_params(key, codebook_emb_dims, codebook_lookup_dims, num_codebooks):
    """Deterministic synthetic init mirroring the nn.Module parameter shapes."""
    C, L, K = codebook_emb_dims, codebook_lookup_dims, num_codebooks
    k1, k2, k3, k4, k5 = jax.random.split(key, 5)
    return {
        # nn.Parameter(torch.randn(1, 1, K, L)) -> stored flat as (K, L)
        "codebook": jax.random.normal(k1, (K, L), jnp.float32),
        # nn.Linear(C, L): stored transposed as (C, L) for x @ w
        "w_in": jax.random.normal(k2, (C, L), jnp.float32) * 0.1,
        "b_in": jax.random.normal(k3, (1, L), jnp.float32) * 0.1,
        # nn.Linear(L, C): stored as (L, C)
        "w_out": jax.random.normal(k4, (L, C), jnp.float32) * 0.1,
        "b_out": jax.random.normal(k5, (1, C), jnp.float32) * 0.1,
    }


def _reference_forward(x, params):
    """Pure-JAX reference reproducing the PyTorch forward semantics."""
    B, C, H, W = x.shape
    K, L = params["codebook"].shape
    x_tok = jnp.transpose(x, (0, 2, 3, 1)).reshape(B, H * W, C)
    z = x_tok @ params["w_in"] + params["b_in"][0]                 # (B, HW, L)
    dist = jnp.sum((z[:, :, None, :] - params["codebook"][None, None]) ** 2,
                   axis=-1)                                        # (B, HW, K)
    idx = jnp.argmin(dist, axis=-1)                                # (B, HW)
    nearest = params["codebook"][idx]                              # (B, HW, L)
    out = nearest @ params["w_out"] + params["b_out"][0]           # (B, HW, C)
    out = jnp.transpose(out.reshape(B, H, W, C), (0, 3, 1, 2))
    return out, nearest


if __name__ == "__main__":
    # TODO(synk): straight-through gradient (STE backward) is a training-time
    # autograd detail and is not part of this forward-only kernel.
    # NOTE: the folded -2*cb@W_in^T distance surrogate reassociates the exact
    # (z - cb)^2 computation; near-perfect ties could in theory flip argmin,
    # which is harmless for VQ and does not occur with these random inputs.
    codebook_emb_dims = 4      # channel dim of x
    codebook_lookup_dims = 16  # L
    num_codebooks = 16         # K
    B, H, W = 2, 16, 16

    key = jax.random.PRNGKey(0)
    kx, kp = jax.random.split(key)
    x = jax.random.normal(kx, (B, codebook_emb_dims, H, W), jnp.float32)
    params = init_params(kp, codebook_emb_dims, codebook_lookup_dims,
                         num_codebooks)

    out, nearest = codebook_forward(x, params)
    jax.block_until_ready((out, nearest))

    ref_out, ref_nearest = _reference_forward(x, params)
    assert out.shape == (B, codebook_emb_dims, H, W)
    assert nearest.shape == (B, H * W, codebook_lookup_dims)
    assert jnp.allclose(out, ref_out, atol=1e-5)
    assert jnp.allclose(nearest, ref_nearest, atol=1e-5)

    print("KERNEL_OK")
</pallas_src>

<mosaic_0001>
module attributes {stable_mosaic.version = 11 : i64} {
  func.func @_codebook_kernel(%arg0: i32, %arg1: i32, %arg2: memref<1x4x256xf32, #tpu.memory_space<vmem>>, %arg3: memref<16x4xf32, #tpu.memory_space<vmem>>, %arg4: memref<16x1xf32, #tpu.memory_space<vmem>>, %arg5: memref<20x16xf32, #tpu.memory_space<vmem>>, %arg6: memref<4x1xf32, #tpu.memory_space<vmem>>, %arg7: memref<1x4x256xf32, #tpu.memory_space<vmem>>, %arg8: memref<1x16x256xf32, #tpu.memory_space<vmem>>) attributes {dimension_semantics = [#tpu.dimension_semantics<parallel>, #tpu.dimension_semantics<parallel>], iteration_bounds = array<i64: 2, 1>, scalar_prefetch = 0 : i64, scratch_operands = 0 : i64, tpu.core_type = #tpu.core_type<tc>, window_params = [{transform_indices = @transform_0, window_bounds = array<i64: 1, 4, 256>}, {pipeline_mode = #tpu.pipeline_mode<synchronous>, transform_indices = @transform_1, window_bounds = array<i64: 16, 4>}, {pipeline_mode = #tpu.pipeline_mode<synchronous>, transform_indices = @transform_2, window_bounds = array<i64: 16, 1>}, {pipeline_mode = #tpu.pipeline_mode<synchronous>, transform_indices = @transform_3, window_bounds = array<i64: 20, 16>}, {pipeline_mode = #tpu.pipeline_mode<synchronous>, transform_indices = @transform_4, window_bounds = array<i64: 4, 1>}, {transform_indices = @transform_5, window_bounds = array<i64: 1, 4, 256>}, {transform_indices = @transform_6, window_bounds = array<i64: 1, 16, 256>}]} {
    %c0 = arith.constant 0 : index
    %c0_0 = arith.constant 0 : index
    %c0_1 = arith.constant 0 : index
    %0 = vector.load %arg2[%c0, %c0_0, %c0_1] : memref<1x4x256xf32, #tpu.memory_space<vmem>>, vector<1x4x256xf32>
    %1 = vector.shape_cast %0 : vector<1x4x256xf32> to vector<4x256xf32>
    %c0_2 = arith.constant 0 : index
    %c0_3 = arith.constant 0 : index
    %2 = vector.load %arg3[%c0_2, %c0_3] : memref<16x4xf32, #tpu.memory_space<vmem>>, vector<16x4xf32>
    %cst = arith.constant dense<0.000000e+00> : vector<16x256xf32>
    %3 = tpu.matmul %2, %1, %cst {dimension_numbers = #tpu.dot_dimension_numbers<[1], [0], [0], [1], [0, 0, 1, 1], [], []>} : vector<16x4xf32>, vector<4x256xf32>, vector<16x256xf32> -> vector<16x256xf32>
    %c0_4 = arith.constant 0 : index
    %c0_5 = arith.constant 0 : index
    %4 = vector.load %arg4[%c0_4, %c0_5] : memref<16x1xf32, #tpu.memory_space<vmem>>, vector<16x1xf32>
    %5 = vector.broadcast %4 : vector<16x1xf32> to vector<16x256xf32>
    %6 = arith.addf %3, %5 : vector<16x256xf32>
    %cst_6 = arith.constant dense<0x7F800000> : vector<256xf32>
    %7 = vector.multi_reduction <minimumf>, %6, %cst_6 [0] : vector<16x256xf32> to vector<256xf32>
    %8 = vector.shape_cast %7 : vector<256xf32> to vector<1x256xf32>
    %9 = tpu.iota {dimensions = array<i32: 0>} : vector<16x256xi32>
    %10 = vector.broadcast %8 : vector<1x256xf32> to vector<16x256xf32>
    %11 = arith.cmpf oeq, %6, %10 : vector<16x256xf32>
    %c16_i32 = arith.constant 16 : i32
    %12 = vector.broadcast %c16_i32 : i32 to vector<16x256xi32>
    %13 = arith.select %11, %9, %12 : vector<16x256xi1>, vector<16x256xi32>
    %cst_7 = arith.constant dense<2147483647> : vector<256xi32>
    %14 = vector.multi_reduction <minsi>, %13, %cst_7 [0] : vector<16x256xi32> to vector<256xi32>
    %15 = vector.shape_cast %14 : vector<256xi32> to vector<1x256xi32>
    %16 = vector.broadcast %15 : vector<1x256xi32> to vector<16x256xi32>
    %17 = arith.cmpi eq, %9, %16 : vector<16x256xi32>
    %18 = arith.extui %17 : vector<16x256xi1> to vector<16x256xi32>
    %19 = arith.sitofp %18 : vector<16x256xi32> to vector<16x256xf32>
    %c0_8 = arith.constant 0 : index
    %c0_9 = arith.constant 0 : index
    %20 = vector.load %arg5[%c0_8, %c0_9] : memref<20x16xf32, #tpu.memory_space<vmem>>, vector<20x16xf32>
    %cst_10 = arith.constant dense<0.000000e+00> : vector<20x256xf32>
    %21 = tpu.matmul %20, %19, %cst_10 {dimension_numbers = #tpu.dot_dimension_numbers<[1], [0], [0], [1], [0, 0, 1, 1], [], []>} : vector<20x16xf32>, vector<16x256xf32>, vector<20x256xf32> -> vector<20x256xf32>
    %22 = vector.extract_strided_slice %21 {offsets = [0, 0], sizes = [16, 256], strides = [1, 1]} : vector<20x256xf32> to vector<16x256xf32>
    %c0_11 = arith.constant 0 : index
    %c0_12 = arith.constant 0 : index
    %c0_13 = arith.constant 0 : index
    %23 = vector.load %arg8[%c0_11, %c0_12, %c0_13] : memref<1x16x256xf32, #tpu.memory_space<vmem>>, vector<1x16x256xf32>
    %24 = vector.shape_cast %23 : vector<1x16x256xf32> to vector<16x256xf32>
    %25 = vector.shape_cast %22 : vector<16x256xf32> to vector<1x16x256xf32>
    tpu.vector_store %arg8[%c0_11, %c0_12, %c0_13], %25 {strides = array<i32>} : memref<1x16x256xf32, #tpu.memory_space<vmem>>, vector<1x16x256xf32>,
    %26 = vector.extract_strided_slice %21 {offsets = [16, 0], sizes = [4, 256], strides = [1, 1]} : vector<20x256xf32> to vector<4x256xf32>
    %c0_14 = arith.constant 0 : index
    %c0_15 = arith.constant 0 : index
    %27 = vector.load %arg6[%c0_14, %c0_15] : memref<4x1xf32, #tpu.memory_space<vmem>>, vector<4x1xf32>
    %28 = vector.broadcast %27 : vector<4x1xf32> to vector<4x256xf32>
    %29 = arith.addf %26, %28 : vector<4x256xf32>
    %c0_16 = arith.constant 0 : index
    %c0_17 = arith.constant 0 : index
    %c0_18 = arith.constant 0 : index
    %30 = vector.load %arg7[%c0_16, %c0_17, %c0_18] : memref<1x4x256xf32, #tpu.memory_space<vmem>>, vector<1x4x256xf32>
    %31 = vector.shape_cast %30 : vector<1x4x256xf32> to vector<4x256xf32>
    %32 = vector.shape_cast %29 : vector<4x256xf32> to vector<1x4x256xf32>
    tpu.vector_store %arg7[%c0_16, %c0_17, %c0_18], %32 {strides = array<i32>} : memref<1x4x256xf32, #tpu.memory_space<vmem>>, vector<1x4x256xf32>,
    return
  }
  func.func @transform_0(%arg0: i32, %arg1: i32) -> (i32, i32, i32) {
    %c0_i32 = arith.constant 0 : i32
    %c0_i32_0 = arith.constant 0 : i32
    return %arg0, %c0_i32, %arg1 : i32, i32, i32
  }
  func.func @transform_1(%arg0: i32, %arg1: i32) -> (i32, i32) {
    %c0_i32 = arith.constant 0 : i32
    %c0_i32_0 = arith.constant 0 : i32
    %c0_i32_1 = arith.constant 0 : i32
    return %c0_i32, %c0_i32_0 : i32, i32
  }
  func.func @transform_2(%arg0: i32, %arg1: i32) -> (i32, i32) {
    %c0_i32 = arith.constant 0 : i32
    %c0_i32_0 = arith.constant 0 : i32
    %c0_i32_1 = arith.constant 0 : i32
    return %c0_i32, %c0_i32_0 : i32, i32
  }
  func.func @transform_3(%arg0: i32, %arg1: i32) -> (i32, i32) {
    %c0_i32 = arith.constant 0 : i32
    %c0_i32_0 = arith.constant 0 : i32
    %c0_i32_1 = arith.constant 0 : i32
    return %c0_i32, %c0_i32_0 : i32, i32
  }
  func.func @transform_4(%arg0: i32, %arg1: i32) -> (i32, i32) {
    %c0_i32 = arith.constant 0 : i32
    %c0_i32_0 = arith.constant 0 : i32
    %c0_i32_1 = arith.constant 0 : i32
    return %c0_i32, %c0_i32_0 : i32, i32
  }
  func.func @transform_5(%arg0: i32, %arg1: i32) -> (i32, i32, i32) {
    %c0_i32 = arith.constant 0 : i32
    %c0_i32_0 = arith.constant 0 : i32
    return %arg0, %c0_i32, %arg1 : i32, i32, i32
  }
  func.func @transform_6(%arg0: i32, %arg1: i32) -> (i32, i32, i32) {
    %c0_i32 = arith.constant 0 : i32
    %c0_i32_0 = arith.constant 0 : i32
    return %arg0, %c0_i32, %arg1 : i32, i32, i32
  }
}

</mosaic_0001>

<llo_original>
// kernel: codebook_forward.1
$region0: #{codebook_forward.1}
  #allocation0 [shape = 'u32[]', space=smem, size = 0x4, offset = 0x4, fixed_abs, tag = 'smem constant byte address 0x4 - core index']
  #allocation1 [shape = 'u32[144,128]{1,0:T(1,128)}', space=vmem, size = 0x12000, scoped, tag = 'internal scratch']
  %s0 = inlined_call_operand.vmem [shape: f32[2,4,256], index: 0, kind: input, shape index: {}]
  %s1 = inlined_call_operand.vmem [shape: f32[16,4], index: 1, kind: input, shape index: {}]
  %s2 = inlined_call_operand.vmem [shape: f32[16,1], index: 2, kind: input, shape index: {}]
  %s3 = inlined_call_operand.vmem [shape: f32[20,16], index: 3, kind: input, shape index: {}]
  %s4 = inlined_call_operand.vmem [shape: f32[4,1], index: 4, kind: input, shape index: {}]
  %s5 = inlined_call_operand.vmem [shape: f32[2,4,256], index: 5, kind: output, shape index: {0}]
  %s6 = inlined_call_operand.hbm [shape: f32[2,16,256], index: 6, kind: output, shape index: {1}]
  %7 = xla_tuple %s5, %s6
  %s8 = sld [smem:[#allocation0]]
  $region61: #{codebook_forward.1} parent=0
    _
  %s10 = ssub.s32 1, %s8
  %s11 = scalar_select 0, %s10, %s8
  $region1: #{codebook_forward.1} parent=0
    #allocation2 [shape = 'u8[32768]{0}', space=vmem, size = 0x8000, scoped, tag = 'output window, operand 1']
    #allocation3 [shape = 's32[2]{0}', space=sflag, size = 0x8, scoped, tag = 'scoped memory for codebook_forward.1']
    %12 = vsyncpa [#allocation3], 0
    %s13 = scalar_lea.sflag [#allocation3], 1
    %14 = vsyncpa %s13, 0
    loop: start=0, step=1, limit=4
    $region2: #{codebook_forward.1} parent=1 // loop_pre_header
      _
    $region3: #{codebook_forward.1} parent=1 // loop_header
      %s16 = sphi 0, %s20
      %p17 = scmp.ge.s32.totalorder %s16, 4
      %s23 = sphi 0, %s35
      %s24 = sphi 0, %s31
      %s25 = sphi 0, %s23
      %s26 = sphi 0, %s24
      %s27 = sphi 0, %s25
      %s28 = sphi 0, %s26
      %s40 = sphi 0, %s42
      %s43 = sphi 0, %s40
      %s44 = sphi 0, %s43
      %s60 = sphi 0, %s44
      %s64 = sphi 0, %s64
      %s66 = sphi 0, %s64
      %s67 = sphi 0, %s66
      %s81 = sphi 0, %s67
      %s85 = sphi 0, %s85
      %s87 = sphi 0, %s85
      %s88 = sphi 0, %s87
      %s102 = sphi 0, %s88
      %s106 = sphi 0, %s106
      %s108 = sphi 0, %s106
      %s109 = sphi 0, %s108
      %s123 = sphi 0, %s109
      %s127 = sphi 0, %s127
      %s129 = sphi 0, %s127
      %s130 = sphi 0, %s129
      %s144 = sphi 0, %s130
      %s152 = sphi 0, %s154
      %s155 = sphi 0, %s152
      %s156 = sphi 0, %s155
      %s172 = sphi 0, %s156
      %s180 = sphi 0, %s182
      %s183 = sphi 0, %s180
      %s184 = sphi 0, %s183
      %s200 = sphi 0, %s184
    $region4: #{codebook_forward.1} parent=1 // loop_header_branch
      %19 = sbr.rel (%p17) target = $region8
    $region5: #{codebook_forward.1} parent=1 // loop_body
      %s21 = ssub.s32 %s16, 1
      %s22 = ssub.s32 %s16, 2
      %s29 = sadd.s32 1, %s24
      %p30 = scmp.ge.s32.totalorder %s29, 1
      %s31 = scalar_select %p30, 0, %s29
      %s32 = sadd.s32 1, %s23
      %s33 = scalar_select %p30, %s32, %s23
      %p34 = scmp.ge.s32.totalorder %s33, 2
      %s35 = scalar_select %p34, 0, %s33
      %s36 = ssub.s32 %s23, %s35
      %s37 = ssub.s32 %s24, %s31
      %s38 = sor.u32 %s36, %s37
      %p39 = scmp.eq.s32.totalorder %s38, 0
      %s41 = sadd.s32 %s40, 1
      %s42 = scalar_select %p39, %s40, %s41
      %p45 = pneg %p39
      %p46 = scmp.eq.s32.totalorder %s16, 1
      %p47 = por %p45, %p46
      %p48 = scmp.ne.s32.totalorder %s40, %s43
      %p49 = scmp.eq.s32.totalorder %s16, 0
      %p50 = por %p48, %p49
      %p51 = scmp.ne.s32.totalorder %s40, %s43
      %p52 = scmp.eq.s32.totalorder %s21, 1
      %p53 = por %p51, %p52
      %p54 = scmp.ne.s32.totalorder %s43, %s44
      %p55 = scmp.eq.s32.totalorder %s21, 0
      %p56 = por %p54, %p55
      %p57 = scmp.ne.s32.totalorder %s43, %s44
      %p58 = scmp.eq.s32.totalorder %s22, 1
      %p59 = por %p57, %p58
      %p61 = scmp.ne.s32.totalorder %s44, %s60
      %p62 = scmp.eq.s32.totalorder %s22, 0
      %p63 = por %p61, %p62
      %s65 = sadd.s32 %s64, 1
      %p68 = scmp.eq.s32.totalorder %s16, 1
      %p69 = scmp.ne.s32.totalorder %s64, %s66
      %p70 = scmp.eq.s32.totalorder %s16, 0
      %p71 = por %p69, %p70
      %p72 = scmp.ne.s32.totalorder %s64, %s66
      %p73 = scmp.eq.s32.totalorder %s21, 1
      %p74 = por %p72, %p73
      %p75 = scmp.ne.s32.totalorder %s66, %s67
      %p76 = scmp.eq.s32.totalorder %s21, 0
      %p77 = por %p75, %p76
      %p78 = scmp.ne.s32.totalorder %s66, %s67
      %p79 = scmp.eq.s32.totalorder %s22, 1
      %p80 = por %p78, %p79
      %p82 = scmp.ne.s32.totalorder %s67, %s81
      %p83 = scmp.eq.s32.totalorder %s22, 0
      %p84 = por %p82, %p83
      %s86 = sadd.s32 %s85, 1
      %p89 = scmp.eq.s32.totalorder %s16, 1
      %p90 = scmp.ne.s32.totalorder %s85, %s87
      %p91 = scmp.eq.s32.totalorder %s16, 0
      %p92 = por %p90, %p91
      %p93 = scmp.ne.s32.totalorder %s85, %s87
      %p94 = scmp.eq.s32.totalorder %s21, 1
      %p95 = por %p93, %p94
      %p96 = scmp.ne.s32.totalorder %s87, %s88
      %p97 = scmp.eq.s32.totalorder %s21, 0
      %p98 = por %p96, %p97
      %p99 = scmp.ne.s32.totalorder %s87, %s88
      %p100 = scmp.eq.s32.totalorder %s22, 1
      %p101 = por %p99, %p100
      %p103 = scmp.ne.s32.totalorder %s88, %s102
      %p104 = scmp.eq.s32.totalorder %s22, 0
      %p105 = por %p103, %p104
      %s107 = sadd.s32 %s106, 1
      %p110 = scmp.eq.s32.totalorder %s16, 1
      %p111 = scmp.ne.s32.totalorder %s106, %s108
      %p112 = scmp.eq.s32.totalorder %s16, 0
      %p113 = por %p111, %p112
      %p114 = scmp.ne.s32.totalorder %s106, %s108
      %p115 = scmp.eq.s32.totalorder %s21, 1
      %p116 = por %p114, %p115
      %p117 = scmp.ne.s32.totalorder %s108, %s109
      %p118 = scmp.eq.s32.totalorder %s21, 0
      %p119 = por %p117, %p118
      %p120 = scmp.ne.s32.totalorder %s108, %s109
      %p121 = scmp.eq.s32.totalorder %s22, 1
      %p122 = por %p120, %p121
      %p124 = scmp.ne.s32.totalorder %s109, %s123
      %p125 = scmp.eq.s32.totalorder %s22, 0
      %p126 = por %p124, %p125
      %s128 = sadd.s32 %s127, 1
      %p131 = scmp.eq.s32.totalorder %s16, 1
      %p132 = scmp.ne.s32.totalorder %s127, %s129
      %p133 = scmp.eq.s32.totalorder %s16, 0
      %p134 = por %p132, %p133
      %p135 = scmp.ne.s32.totalorder %s127, %s129
      %p136 = scmp.eq.s32.totalorder %s21, 1
      %p137 = por %p135, %p136
      %p138 = scmp.ne.s32.totalorder %s129, %s130
      %p139 = scmp.eq.s32.totalorder %s21, 0
      %p140 = por %p138, %p139
      %p141 = scmp.ne.s32.totalorder %s129, %s130
      %p142 = scmp.eq.s32.totalorder %s22, 1
      %p143 = por %p141, %p142
      %p145 = scmp.ne.s32.totalorder %s130, %s144
      %p146 = scmp.eq.s32.totalorder %s22, 0
      %p147 = por %p145, %p146
      %s148 = ssub.s32 %s23, %s35
      %s149 = ssub.s32 %s24, %s31
      %s150 = sor.u32 %s148, %s149
      %p151 = scmp.eq.s32.totalorder %s150, 0
      %s153 = sadd.s32 %s152, 1
      %s154 = scalar_select %p151, %s152, %s153
      %p157 = pneg %p151
      %p158 = scmp.eq.s32.totalorder %s16, 1
      %p159 = por %p157, %p158
      %p160 = scmp.ne.s32.totalorder %s152, %s155
      %p161 = scmp.eq.s32.totalorder %s16, 0
      %p162 = por %p160, %p161
      %p163 = scmp.ne.s32.totalorder %s152, %s155
      %p164 = scmp.eq.s32.totalorder %s21, 1
      %p165 = por %p163, %p164
      %p166 = scmp.ne.s32.totalorder %s155, %s156
      %p167 = scmp.eq.s32.totalorder %s21, 0
      %p168 = por %p166, %p167
      %p169 = scmp.ne.s32.totalorder %s155, %s156
      %p170 = scmp.eq.s32.totalorder %s22, 1
      %p171 = por %p169, %p170
      %p173 = scmp.ne.s32.totalorder %s156, %s172
      %p174 = scmp.eq.s32.totalorder %s22, 0
      %p175 = por %p173, %p174
      %s176 = ssub.s32 %s23, %s35
      %s177 = ssub.s32 %s24, %s31
      %s178 = sor.u32 %s176, %s177
      %p179 = scmp.eq.s32.totalorder %s178, 0
      %s181 = sadd.s32 %s180, 1
      %s182 = scalar_select %p179, %s180, %s181
      %p185 = pneg %p179
      %p186 = scmp.eq.s32.totalorder %s16, 1
      %p187 = por %p185, %p186
      %p188 = scmp.ne.s32.totalorder %s180, %s183
      %p189 = scmp.eq.s32.totalorder %s16, 0
      %p190 = por %p188, %p189
      %p191 = scmp.ne.s32.totalorder %s180, %s183
      %p192 = scmp.eq.s32.totalorder %s21, 1
      %p193 = por %p191, %p192
      %p194 = scmp.ne.s32.totalorder %s183, %s184
      %p195 = scmp.eq.s32.totalorder %s21, 0
      %p196 = por %p194, %p195
      %p197 = scmp.ne.s32.totalorder %s183, %s184
      %p198 = scmp.eq.s32.totalorder %s22, 1
      %p199 = por %p197, %p198
      %p201 = scmp.ne.s32.totalorder %s184, %s200
      %p202 = scmp.eq.s32.totalorder %s22, 0
      %p203 = por %p201, %p202
      %p204 = scmp.le.s32.totalorder 1, %s16
      %p205 = scmp.lt.s32.totalorder %s16, 3
      %p206 = pnand %p204, %p205
      %p207 = pneg %p206
      // Predicated region
      $region9: #{codebook_forward.1} parent=5 // pred_check
        _
      $region10: #{codebook_forward.1} parent=5 // pred_check_branch
        %209 = sbr.rel (%p206) target = $region12
      $region11: #{codebook_forward.1} parent=5 // pred_region
        %s210 = ssub.s32 %s16, 1
        // Predicated region
        $region13: #{codebook_forward.1} parent=11 // pred_check
          %p211 = pneg %p77
        $region14: #{codebook_forward.1} parent=11 // pred_check_branch
          %213 = sbr.rel (%p211) target = $region16
        $region15: #{codebook_forward.1} parent=11 // pred_region
          _
        $region16: #{codebook_forward.1} parent=11 // pred_fallthru
          _
        // Predicated region
        $region17: #{codebook_forward.1} parent=11 // pred_check
          %p214 = pneg %p98
        $region18: #{codebook_forward.1} parent=11 // pred_check_branch
          %216 = sbr.rel (%p214) target = $region20
        $region19: #{codebook_forward.1} parent=11 // pred_region
          _
        $region20: #{codebook_forward.1} parent=11 // pred_fallthru
          _
        // Predicated region
        $region21: #{codebook_forward.1} parent=11 // pred_check
          %p217 = pneg %p119
        $region22: #{codebook_forward.1} parent=11 // pred_check_branch
          %219 = sbr.rel (%p217) target = $region24
        $region23: #{codebook_forward.1} parent=11 // pred_region
          _
        $region24: #{codebook_forward.1} parent=11 // pred_fallthru
          _
        // Predicated region
        $region25: #{codebook_forward.1} parent=11 // pred_check
          %p220 = pneg %p140
        $region26: #{codebook_forward.1} parent=11 // pred_check_branch
          %222 = sbr.rel (%p220) target = $region28
        $region27: #{codebook_forward.1} parent=11 // pred_region
          _
        $region28: #{codebook_forward.1} parent=11 // pred_fallthru
          _
      $region12: #{codebook_forward.1} parent=5 // pred_fallthru
        _
      %p223 = scmp.lt.s32.totalorder %s16, 2
      // Predicated region
      $region29: #{codebook_forward.1} parent=5 // pred_check
        %p224 = pneg %p223
      $region30: #{codebook_forward.1} parent=5 // pred_check_branch
        %226 = sbr.rel (%p224) target = $region32
      $region31: #{codebook_forward.1} parent=5 // pred_region
        // Predicated region
        $region33: #{codebook_forward.1} parent=31 // pred_check
          %p227 = pneg %p50
        $region34: #{codebook_forward.1} parent=31 // pred_check_branch
          %229 = sbr.rel (%p227) target = $region36
        $region35: #{codebook_forward.1} parent=31 // pred_region
          %s230 = smul.u32 2, %s24
          %p231 = scmp.lt.s32.totalorder %s23, 1
          %s232 = scalar_select %p231, %s23, 1
          %p233 = scmp.lt.s32.totalorder %s230, 1
          %s234 = scalar_select %p233, %s230, 1
          %s235 = smul.addr %s232, 2
          %s236 = sadd.s32 %s234, %s235
          %s237 = smul.addr %s236, 4
          %s238 = scalar_lea.vmem %s0, %s237
          %s239 = smul.u32 2, %s24
        $region36: #{codebook_forward.1} parent=31 // pred_fallthru
          _
      $region32: #{codebook_forward.1} parent=5 // pred_fallthru
        _
      %p240 = scmp.le.s32.totalorder 1, %s16
      %p241 = scmp.lt.s32.totalorder %s16, 3
      %p242 = pnand %p240, %p241
      %p243 = pneg %p242
      // Predicated region
      $region37: #{codebook_forward.1} parent=5 // pred_check
        _
      $region38: #{codebook_forward.1} parent=5 // pred_check_branch
        %245 = sbr.rel (%p242) target = $region40
      $region39: #{codebook_forward.1} parent=5 // pred_region
        %s246 = ssub.s32 %s16, 1
        %s247 = smul.u32 2, %s26
        %p248 = scmp.lt.s32.totalorder %s25, 1
        %s249 = scalar_select %p248, %s25, 1
        %p250 = scmp.lt.s32.totalorder %s247, 1
        %s251 = scalar_select %p250, %s247, 1
        %s252 = smul.addr %s249, 2
        %s253 = sadd.s32 %s251, %s252
        %s254 = smul.addr %s253, 4
        %s255 = scalar_lea.vmem %s0, %s254
        %p256 = pneg %p56
        %p257 = pneg %p53
        %p258 = pneg %p77
        %p259 = pneg %p74
        %p260 = pneg %p98
        %p261 = pneg %p95
        %p262 = pneg %p119
        %p263 = pneg %p116
        %p264 = pneg %p140
        %p265 = pneg %p137
        %p266 = pneg %p168
        %p267 = pneg %p165
        %s268 = smul.u32 2, %s26
        %p269 = scmp.lt.s32.totalorder %s25, 1
        %s270 = scalar_select %p269, %s25, 1
        %p271 = scmp.lt.s32.totalorder %s268, 1
        %s272 = scalar_select %p271, %s268, 1
        %s273 = smul.addr %s270, 2
        %s274 = sadd.s32 %s272, %s273
        %s275 = smul.addr %s274, 4
        %s276 = scalar_lea.vmem %s5, %s275
        %p277 = pneg %p196
        %p278 = pneg %p193
        %s279 = sand.u32 %s183, 1
        %s280 = scalar_lea.sflag [#allocation3], %s279
        %s281 = sand.u32 %s183, 1
        %s282 = smul.addr %s281, 32
        %s283 = scalar_lea.vmem [#allocation2], %s282
        %s284 = smul.u32 2, %s26
        %p285 = scmp.lt.s32.totalorder %s25, 1
        %s286 = scalar_select %p285, %s25, 1
        %p287 = scmp.lt.s32.totalorder %s284, 1
        %s288 = scalar_select %p287, %s284, 1
        %s289 = smul.addr %s286, 2
        %s290 = sadd.s32 %s288, %s289
        %s291 = smul.addr %s290, 4
        %s292 = scalar_lea.vmem %s0, %s291
        %s293 = smul.u32 2, %s26
        %s294 = smul.u32 2, %s26
        %p295 = scmp.lt.s32.totalorder %s25, 1
        %s296 = scalar_select %p295, %s25, 1
        %p297 = scmp.lt.s32.totalorder %s294, 1
        %s298 = scalar_select %p297, %s294, 1
        %s299 = smul.addr %s296, 2
        %s300 = sadd.s32 %s298, %s299
        %s301 = smul.addr %s300, 4
        %s302 = scalar_lea.vmem %s5, %s301
        %s303 = smul.u32 2, %s26
        %s304 = smul.u32 2, %s26
        %v305 = vld [vmem:[%s292] sm:$0xff]
        %v306 = vld [vmem:[%s1] sm:$0xff]
        %v307 = vld [vmem:[%s1 + $0x8] sm:$0xff]
        %v308 = vld [vmem:[%s2] sm:$0xff]
        %v309 = vld [vmem:[%s2 + $0x8] sm:$0xff]
        %311 = vset.pattern.permute.xlu0 0
        %312 = vperm.xlu0 %311, %v308
        %v313 = vpop.permute.xlu0 %312
        %316 = vset.pattern.permute.xlu0 0
        %317 = vperm.xlu0 %316, %v309
        %v318 = vpop.permute.xlu0 %317
        %v321 = vcombine.high %v305, %v305
        %vm322 = vcmask 31744
        %v324 = vsel %vm322, %v306, 0
        %v327 = vsel %vm322, %v307, 0
        %vm329 = vcmask 1043456
        %v330 = vsel %vm329, %v305, 0
        %v332 = vsel %vm329, %v321, 0
        %334 = vmatprep.subr.mxu0 0.0
        %335 = vmatpush1.msra.mxu0 0.0
        %336 = vmatprep.subr.mxu0 0.0
        %337 = vmatpush1.msra.mxu0 0.0
        %338 = vmatprep.subr.mxu0 0.0
        %339 = vmatpush1.msra.mxu0 0.0
        %340 = vmatprep.subr.mxu0 0.0
        %341 = vmatpush1.msra.mxu0 0.0
        %342 = vmatprep.subr.mxu0 0.0
        %343 = vmatpush1.msra.mxu0 0.0
        %344 = vmatprep.subr.mxu0 0.0
        %345 = vmatpush1.msra.mxu0 0.0
        %346 = vmatprep.subr.mxu0 0.0
        %347 = vmatpush1.msra.mxu0 0.0
        %348 = vmatprep.subr.mxu0 0.0
        %349 = vmatpush1.msra.mxu0 0.0
        %350 = vmatprep.subr.mxu0 0.0
        %351 = vmatpush1.msra.mxu0 0.0
        %352 = vmatprep.subr.mxu0 0.0
        %353 = vmatpush1.msra.mxu0 0.0
        %354 = vmatprep.subr.mxu0 0.0
        %355 = vmatpush1.msra.mxu0 0.0
        %356 = vmatprep.subr.mxu0 0.0
        %357 = vmatpush1.msra.mxu0 0.0
        %358 = vmatprep.subr.mxu0 0.0
        %359 = vmatpush1.msra.mxu0 0.0
        %360 = vmatprep.subr.mxu0 0.0
        %361 = vmatpush1.msra.mxu0 0.0
        %362 = vmatprep.subr.mxu0 0.0
        %363 = vmatpush1.msra.mxu0 0.0
        %364 = vmatprep.subr.mxu0 %v332
        %365 = vmatpush1.msra.mxu0 %v330
        %366 = vmatprep.subr.mxu0 0.0
        %367 = vmatpush2.msra.mxu0 0.0
        %368 = vmatprep.subr.mxu0 0.0
        %369 = vmatpush2.msra.mxu0 0.0
        %370 = vmatprep.subr.mxu0 0.0
        %371 = vmatpush2.msra.mxu0 0.0
        %372 = vmatprep.subr.mxu0 0.0
        %373 = vmatpush2.msra.mxu0 0.0
        %374 = vmatprep.subr.mxu0 0.0
        %375 = vmatpush2.msra.mxu0 0.0
        %376 = vmatprep.subr.mxu0 0.0
        %377 = vmatpush2.msra.mxu0 0.0
        %378 = vmatprep.subr.mxu0 0.0
        %379 = vmatpush2.msra.mxu0 0.0
        %380 = vmatprep.subr.mxu0 0.0
        %381 = vmatpush2.msra.mxu0 0.0
        %382 = vmatprep.subr.mxu0 0.0
        %383 = vmatpush2.msra.mxu0 0.0
        %384 = vmatprep.subr.mxu0 0.0
        %385 = vmatpush2.msra.mxu0 0.0
        %386 = vmatprep.subr.mxu0 0.0
        %387 = vmatpush2.msra.mxu0 0.0
        %388 = vmatprep.subr.mxu0 0.0
        %389 = vmatpush2.msra.mxu0 0.0
        %390 = vmatprep.subr.mxu0 0.0
        %391 = vmatpush2.msra.mxu0 0.0
        %392 = vmatprep.subr.mxu0 0.0
        %393 = vmatpush2.msra.mxu0 0.0
        %394 = vmatprep.subr.mxu0 0.0
        %395 = vmatpush2.msra.mxu0 0.0
        %396 = vmatprep.subr.mxu0 0.0
        %397 = vmatpush2.msra.mxu0 0.0
        %398 = vmatprep.mubr.f32.mxu0 0.0
        %399 = vmatmul.mubr.f32.gmra.mxu0 %v324
        %v400 = vpop.f32.mrf.mxu0
        %v401 = vadd.f32 %v313, %v400
        %v402 = vpop.f32.mrf.mxu0
        %v403 = vadd.f32 %v313, %v402
        %404 = vmatprep.mubr.f32.mxu0 0.0
        %405 = vmatmul.mubr.f32.gmra.mxu0 %v327
        %v406 = vpop.f32.mrf.mxu0
        %v407 = vadd.f32 %v318, %v406
        %v408 = vpop.f32.mrf.mxu0
        %v409 = vadd.f32 %v318, %v408
        %410 = vdwg.mxu0
        %v411 = vmin.f32 %v401, %v407
        %v412 = vrot.slane %v411, 4
        %v413 = vmin.f32 %v411, %v412
        %v414 = vrot.slane %v413, 2
        %v415 = vmin.f32 %v413, %v414
        %v416 = vrot.slane %v415, 1
        %v417 = vmin.f32 %v415, %v416
        %v418 = vmin.f32 %v403, %v409
        %v419 = vrot.slane %v418, 4
        %v420 = vmin.f32 %v418, %v419
        %v421 = vrot.slane %v420, 2
        %v422 = vmin.f32 %v420, %v421
        %v423 = vrot.slane %v422, 1
        %v424 = vmin.f32 %v422, %v423
        %v425 = vlaneseq
        %v426 = vshrl.u32 %v425, 7
        %v427 = vadd.s32 %v426, 8
        %vm428 = vcmp.eq.f32.partialorder %v401, %v417
        %vm429 = vcmp.eq.f32.partialorder %v403, %v424
        %vm430 = vcmp.eq.f32.partialorder %v407, %v417
        %vm431 = vcmp.eq.f32.partialorder %v409, %v424
        %v432 = vsel %vm428, %v426, 16
        %v433 = vsel %vm429, %v426, 16
        %v434 = vsel %vm430, %v427, 16
        %v435 = vsel %vm431, %v427, 16
        %vm436 = vcmp.lt.s32.totalorder %v432, %v434
        %v437 = vsel %vm436, %v432, %v434
        %v438 = vrot.slane %v437, 4
        %vm439 = vcmp.lt.s32.totalorder %v437, %v438
        %v440 = vsel %vm439, %v437, %v438
        %v441 = vrot.slane %v440, 2
        %vm442 = vcmp.lt.s32.totalorder %v440, %v441
        %v443 = vsel %vm442, %v440, %v441
        %v444 = vrot.slane %v443, 1
        %vm445 = vcmp.lt.s32.totalorder %v443, %v444
        %v446 = vsel %vm445, %v443, %v444
        %vm447 = vcmp.lt.s32.totalorder %v433, %v435
        %v448 = vsel %vm447, %v433, %v435
        %v449 = vrot.slane %v448, 4
        %vm450 = vcmp.lt.s32.totalorder %v448, %v449
        %v451 = vsel %vm450, %v448, %v449
        %v452 = vrot.slane %v451, 2
        %vm453 = vcmp.lt.s32.totalorder %v451, %v452
        %v454 = vsel %vm453, %v451, %v452
        %v455 = vrot.slane %v454, 1
        %vm456 = vcmp.lt.s32.totalorder %v454, %v455
        %v457 = vsel %vm456, %v454, %v455
        %vm458 = vcmp.eq.s32.totalorder %v426, %v446
        %vm459 = vcmp.eq.s32.totalorder %v426, %v457
        %vm460 = vcmp.eq.s32.totalorder %v427, %v446
        %vm461 = vcmp.eq.s32.totalorder %v427, %v457
        %v462 = vsel %vm458, 1, 0
        %v463 = vsel %vm459, 1, 0
        %v464 = vsel %vm460, 1, 0
        %v465 = vsel %vm461, 1, 0
        %v466 = vcvt.s32.f32 %v462
        %v467 = vcvt.s32.f32 %v463
        %v468 = vcvt.s32.f32 %v464
        %v469 = vcvt.s32.f32 %v465
        %v470 = vld [vmem:[%s3] sm:$0xff]
        %v471 = vld [vmem:[%s3 + $0x8] sm:$0xff]
        %v472 = vld [vmem:[%s3 + $0x10] sm:$0xf]
        %vm473 = vcmask 130048
        %v475 = vsel %vm473, %v470, 0
        %v478 = vsel %vm473, %v471, 0
        %v481 = vsel %vm473, %v472, 0
        %483 = vmatprep.subr.mxu0 0.0
        %484 = vmatpush1.msra.mxu0 0.0
        %485 = vmatprep.subr.mxu0 0.0
        %486 = vmatpush1.msra.mxu0 0.0
        %487 = vmatprep.subr.mxu0 0.0
        %488 = vmatpush1.msra.mxu0 0.0
        %489 = vmatprep.subr.mxu0 0.0
        %490 = vmatpush1.msra.mxu0 0.0
        %491 = vmatprep.subr.mxu0 0.0
        %492 = vmatpush1.msra.mxu0 0.0
        %493 = vmatprep.subr.mxu0 0.0
        %494 = vmatpush1.msra.mxu0 0.0
        %495 = vmatprep.subr.mxu0 0.0
        %496 = vmatpush1.msra.mxu0 0.0
        %497 = vmatprep.subr.mxu0 0.0
        %498 = vmatpush1.msra.mxu0 0.0
        %499 = vmatprep.subr.mxu0 0.0
        %500 = vmatpush1.msra.mxu0 0.0
        %501 = vmatprep.subr.mxu0 0.0
        %502 = vmatpush1.msra.mxu0 0.0
        %503 = vmatprep.subr.mxu0 0.0
        %504 = vmatpush1.msra.mxu0 0.0
        %505 = vmatprep.subr.mxu0 0.0
        %506 = vmatpush1.msra.mxu0 0.0
        %507 = vmatprep.subr.mxu0 0.0
        %508 = vmatpush1.msra.mxu0 0.0
        %509 = vmatprep.subr.mxu0 0.0
        %510 = vmatpush1.msra.mxu0 0.0
        %511 = vmatprep.subr.mxu0 %v469
        %512 = vmatpush1.msra.mxu0 %v468
        %513 = vmatprep.subr.mxu0 %v467
        %514 = vmatpush1.msra.mxu0 %v466
        %515 = vmatprep.subr.mxu0 0.0
        %516 = vmatpush2.msra.mxu0 0.0
        %517 = vmatprep.subr.mxu0 0.0
        %518 = vmatpush2.msra.mxu0 0.0
        %519 = vmatprep.subr.mxu0 0.0
        %520 = vmatpush2.msra.mxu0 0.0
        %521 = vmatprep.subr.mxu0 0.0
        %522 = vmatpush2.msra.mxu0 0.0
        %523 = vmatprep.subr.mxu0 0.0
        %524 = vmatpush2.msra.mxu0 0.0
        %525 = vmatprep.subr.mxu0 0.0
        %526 = vmatpush2.msra.mxu0 0.0
        %527 = vmatprep.subr.mxu0 0.0
        %528 = vmatpush2.msra.mxu0 0.0
        %529 = vmatprep.subr.mxu0 0.0
        %530 = vmatpush2.msra.mxu0 0.0
        %531 = vmatprep.subr.mxu0 0.0
        %532 = vmatpush2.msra.mxu0 0.0
        %533 = vmatprep.subr.mxu0 0.0
        %534 = vmatpush2.msra.mxu0 0.0
        %535 = vmatprep.subr.mxu0 0.0
        %536 = vmatpush2.msra.mxu0 0.0
        %537 = vmatprep.subr.mxu0 0.0
        %538 = vmatpush2.msra.mxu0 0.0
        %539 = vmatprep.subr.mxu0 0.0
        %540 = vmatpush2.msra.mxu0 0.0
        %541 = vmatprep.subr.mxu0 0.0
        %542 = vmatpush2.msra.mxu0 0.0
        %543 = vmatprep.subr.mxu0 0.0
        %544 = vmatpush2.msra.mxu0 0.0
        %545 = vmatprep.subr.mxu0 0.0
        %546 = vmatpush2.msra.mxu0 0.0
        %547 = vmatprep.mubr.f32.mxu0 0.0
        %548 = vmatmul.mubr.f32.gmra.mxu0 %v475
        %v549 = vpop.f32.mrf.mxu0
        %v550 = vadd.f32 0.0, %v549
        %v551 = vpop.f32.mrf.mxu0
        %v552 = vadd.f32 0.0, %v551
        %553 = vmatprep.mubr.f32.mxu0 0.0
        %554 = vmatmul.mubr.f32.gmra.mxu0 %v478
        %v555 = vpop.f32.mrf.mxu0
        %v556 = vadd.f32 0.0, %v555
        %v557 = vpop.f32.mrf.mxu0
        %v558 = vadd.f32 0.0, %v557
        %559 = vmatprep.mubr.f32.mxu0 0.0
        %560 = vmatmul.mubr.f32.gmra.mxu0 %v481
        %v561 = vpop.f32.mrf.mxu0
        %v562 = vadd.f32 0.0, %v561
        %v563 = vpop.f32.mrf.mxu0
        %v564 = vadd.f32 0.0, %v563
        %565 = vdwg.mxu0
        %566 = vst [vmem:[%s283] sm:$0xff] %v550
        %567 = vst [vmem:[%s283 + $0x8] sm:$0xff] %v552
        %568 = vst [vmem:[%s283 + $0x10] sm:$0xff] %v556
        %569 = vst [vmem:[%s283 + $0x18] sm:$0xff] %v558
        %v570 = vld [vmem:[%s4] sm:$0xf]
        %572 = vset.pattern.permute.xlu0 0
        %573 = vperm.xlu0 %572, %v570
        %v574 = vpop.permute.xlu0 %573
        %v576 = vadd.f32 %v562, %v574
        %v577 = vadd.f32 %v564, %v574
        %v580 = vcombine.low %v576, %v577
        %582 = vst [vmem:[%s302] sm:$0xff] %v580
        %s583 = smul.u32 2, %s26
        %p584 = scmp.lt.s32.totalorder %s25, 1
        %s585 = scalar_select %p584, %s25, 1
        %p586 = scmp.lt.s32.totalorder %s583, 1
        %s587 = scalar_select %p586, %s583, 1
        %s588 = smul.addr %s585, 2
        %s589 = sadd.s32 %s587, %s588
        %s590 = smul.addr %s589, 4
        %s591 = scalar_lea.vmem %s5, %s590
        %s592 = sand.u32 %s183, 1
        %s593 = scalar_lea.sflag [#allocation3], %s592
        %s594 = sand.u32 %s183, 1
        %s595 = smul.addr %s594, 32
        %s596 = scalar_lea.vmem [#allocation2], %s595
        // Predicated region
        $region41: #{codebook_forward.1} parent=39 // pred_check
          %p597 = pneg %p165
        $region42: #{codebook_forward.1} parent=39 // pred_check_branch
          %599 = sbr.rel (%p597) target = $region44
        $region43: #{codebook_forward.1} parent=39 // pred_region
          %s600 = smul.u32 2, %s26
        $region44: #{codebook_forward.1} parent=39 // pred_fallthru
          _
        // Predicated region
        $region45: #{codebook_forward.1} parent=39 // pred_check
          %p601 = pneg %p193
        $region46: #{codebook_forward.1} parent=39 // pred_check_branch
          %603 = sbr.rel (%p601) target = $region48
        $region47: #{codebook_forward.1} parent=39 // pred_region
          %s604 = smul.u32 2, %s26
          %s606 = ssub.s32 512, 512
          %607 = vsyncadd %s593, %s606
          %s608 = smul.addr %s25, 4
          %s609 = sadd.s32 %s604, %s608
          %s610 = smul.addr %s609, 128
          %s611 = scalar_lea.hbm %s6, %s610
          %s612 = sshll.u32 %s596, 4
          %s613 = int_to_ptr.vmem [resolvable:$true] %s612
          %618 = dma.vmem_to_hbm [thread:$0]  %s613, 512, %s611, %s593, 256, 256, 16
        $region48: #{codebook_forward.1} parent=39 // pred_fallthru
          _
      $region40: #{codebook_forward.1} parent=5 // pred_fallthru
        _
      %p619 = scmp.le.s32.totalorder 2, %s16
      // Predicated region
      $region49: #{codebook_forward.1} parent=5 // pred_check
        %p620 = pneg %p619
      $region50: #{codebook_forward.1} parent=5 // pred_check_branch
        %622 = sbr.rel (%p620) target = $region52
      $region51: #{codebook_forward.1} parent=5 // pred_region
        %s623 = ssub.s32 %s16, 2
        // Predicated region
        $region53: #{codebook_forward.1} parent=51 // pred_check
          %p624 = pneg %p171
        $region54: #{codebook_forward.1} parent=51 // pred_check_branch
          %626 = sbr.rel (%p624) target = $region56
        $region55: #{codebook_forward.1} parent=51 // pred_region
          %s627 = smul.u32 2, %s28
          %p628 = scmp.lt.s32.totalorder %s27, 1
          %s629 = scalar_select %p628, %s27, 1
          %p630 = scmp.lt.s32.totalorder %s627, 1
          %s631 = scalar_select %p630, %s627, 1
          %s632 = smul.addr %s629, 2
          %s633 = sadd.s32 %s631, %s632
          %s634 = smul.addr %s633, 4
          %s635 = scalar_lea.vmem %s5, %s634
        $region56: #{codebook_forward.1} parent=51 // pred_fallthru
          _
        // Predicated region
        $region57: #{codebook_forward.1} parent=51 // pred_check
          %p636 = pneg %p199
        $region58: #{codebook_forward.1} parent=51 // pred_check_branch
          %638 = sbr.rel (%p636) target = $region60
        $region59: #{codebook_forward.1} parent=51 // pred_region
          %s639 = sand.u32 %s184, 1
          %s640 = scalar_lea.sflag [#allocation3], %s639
          %s641 = sand.u32 %s184, 1
          %s642 = smul.addr %s641, 32
          %s643 = scalar_lea.vmem [#allocation2], %s642
          %644 = dma.done %s640, 512
        $region60: #{codebook_forward.1} parent=51 // pred_fallthru
          _
      $region52: #{codebook_forward.1} parent=5 // pred_fallthru
        _
    $region6: #{codebook_forward.1} parent=1 // loop_footer
      %s20 = sadd.s32 1, %s16
    $region7: #{codebook_forward.1} parent=1 // loop_footer_branch
      %15 = sbr.rel target = $region3
    $region8: #{codebook_forward.1} parent=1 // loop_exit
      _
    %645 = vsyncpa [#allocation3], 1
    %s646 = scalar_lea.sflag [#allocation3], 1
    %647 = vsyncpa %s646, 1

</llo_original>
